<compile_context>
chip_gen: v5e
topology: v5e:2x2
jax: 0.10.0
libtpu: 0.0.40
codegen_flags: <defaults>
</compile_context>

<pallas_src>
import jax
import jax.numpy as jnp
from jax.experimental import pallas as pl
from jax.experimental.pallas import tpu as pltpu

LANE = 128
SUBLANE = 8
F32 = 4


def _round_up(x, m):
    return ((x + m - 1) // m) * m


def _pad_to(a, shape):
    pads = [(0, t - s) for s, t in zip(a.shape, shape)]
    if any(p[1] for p in pads):
        return jnp.pad(a, pads)
    return a


def _vmem_capacity_bytes():
    try:
        return int(pltpu.get_tpu_info().vmem_capacity_bytes)
    except Exception:
        return 64 * 2**20  # conservative default (v7x per-core VMEM)


def rl_mlp_kernel(x_ref, w1_ref, b1_ref, w2_ref, b2_ref, w3_ref, b3_ref, out_ref):
    x = x_ref[...]

    # Layer 1: Linear(in_dim -> in_p) + ReLU   (MXU, f32 accumulation)
    h1 = jnp.dot(x, w1_ref[...], preferred_element_type=jnp.float32) + b1_ref[...]
    h1 = jnp.maximum(h1, 0.0).astype(w2_ref.dtype)

    # Layer 2: Linear(in_p -> in_p) + ReLU
    h2 = jnp.dot(h1, w2_ref[...], preferred_element_type=jnp.float32) + b2_ref[...]
    h2 = jnp.maximum(h2, 0.0)

    # Layer 3: Linear(in_p -> 1) + sigmoid.  w3 is a lane-dense (1, in_p) row:
    # VPU elementwise mul + XLU cross-lane reduce instead of an N=1 MXU pass.
    logit = jnp.sum(h2 * w3_ref[...], axis=-1, keepdims=True) + b3_ref[0, 0]
    out_ref[...] = jax.nn.sigmoid(logit)


def prepare_params(params, *, stream_dtype=jnp.float32):
    """Pad/cast the call-invariant weights ONCE (outside the per-call path)."""
    in_dim = params["w1"].shape[0]
    # Align K/N to 256 only when large enough to be compute-bound (full MXU
    # occupancy on v6e/v7x); 128 otherwise.
    lane_mult = 256 if in_dim >= 1024 else LANE
    in_p = _round_up(max(in_dim, LANE), lane_mult)
    sdt = jnp.dtype(stream_dtype)
    return {
        "in_dim": in_dim,
        "in_p": in_p,
        "stream_dtype": sdt,
        "w1": _pad_to(params["w1"].astype(jnp.float32), (in_dim, in_p)).astype(sdt),
        "b1": _pad_to(params["b1"].reshape(1, -1).astype(jnp.float32), (1, in_p)),
        "w2": _pad_to(params["w2"].astype(jnp.float32), (in_p, in_p)).astype(sdt),
        "b2": _pad_to(params["b2"].reshape(1, -1).astype(jnp.float32), (1, in_p)),
        "w3": _pad_to(params["w3"].reshape(1, -1).astype(jnp.float32), (1, in_p)),
        "b3": params["b3"].reshape(1, 1).astype(jnp.float32),
    }


def _pick_tile_m(batch, in_dim, in_p, x_bytes, w_bytes, tile_m=None):
    """Derive the batch tile from the VMEM budget; return (tm, vmem_limit_bytes)."""
    cap = _vmem_capacity_bytes()
    budget = int(cap * 0.7)  # headroom for compiler-internal scratch / vregs
    fixed = w_bytes * (in_dim * in_p + in_p * in_p) + F32 * 3 * in_p   # resident w/b
    per_row = (2 * in_dim * x_bytes   # x tile, double-buffered
               + 2 * in_p * F32       # h1 / h2 f32 intermediates
               + 2 * F32)             # out tile, double-buffered
    tm = max(SUBLANE, (budget - fixed) // per_row)
    if tile_m is not None:
        tm = min(tm, tile_m)
    tm = min(tm, 4096)                                    # per-step ceiling
    tm = min(tm, _round_up(batch, SUBLANE))               # no point beyond batch
    tm = min(tm, _round_up(pl.cdiv(batch, 2), SUBLANE))   # >= 2 grid steps (megacore)
    tm = max(SUBLANE, (tm // SUBLANE) * SUBLANE)
    vmem_need = fixed + tm * per_row
    vmem_limit = int(min(cap, max(32 * 2**20, vmem_need * 5 // 4 + (2 << 20))))
    return int(tm), vmem_limit


def rl_forward(x, prepped, *, tile_m=None):
    """x: (batch, in_dim). prepped: output of prepare_params. Returns (batch, 1) f32."""
    batch, in_dim = x.shape
    assert in_dim == prepped["in_dim"], (in_dim, prepped["in_dim"])
    in_p = prepped["in_p"]
    sdt = prepped["stream_dtype"]
    x = x.astype(sdt)

    x_bytes = sdt.itemsize
    tm, vmem_limit = _pick_tile_m(batch, in_dim, in_p, x_bytes, x_bytes, tile_m)
    n_tiles = pl.cdiv(batch, tm)   # ragged final block; OOB rows never written back

    cost = pl.CostEstimate(
        flops=2 * batch * in_p * (in_dim + in_p) + 4 * batch * in_p,
        transcendentals=2 * batch,  # sigmoid: exp + reciprocal per row
        bytes_accessed=(x_bytes * (batch * in_dim + in_dim * in_p + in_p * in_p)
                        + F32 * (3 * in_p + 1 + batch)),
    )

    def call(single_buffer_weights):
        if single_buffer_weights:
            def resident(shape):
                # Constant index_map -> block never changes; single-buffer it.
                return pl.BlockSpec(shape, lambda i: (0, 0),
                                    pipeline_mode=pl.Buffered(1))
        else:
            def resident(shape):
                return pl.BlockSpec(shape, lambda i: (0, 0))

        return pl.pallas_call(
            rl_mlp_kernel,
            out_shape=jax.ShapeDtypeStruct((batch, 1), jnp.float32),
            grid=(n_tiles,),
            in_specs=[
                pl.BlockSpec((tm, in_dim), lambda i: (i, 0)),   # x: unpadded, streamed
                resident((in_dim, in_p)),                       # w1: VMEM-resident
                resident((1, in_p)),                            # b1
                resident((in_p, in_p)),                         # w2
                resident((1, in_p)),                            # b2
                resident((1, in_p)),                            # w3 row (lane-dense)
                pl.BlockSpec(memory_space=pltpu.MemorySpace.SMEM),  # b3 scalar
            ],
            out_specs=pl.BlockSpec((tm, 1), lambda i: (i, 0)),
            compiler_params=pltpu.CompilerParams(
                dimension_semantics=("parallel",),   # megacore split over batch
                vmem_limit_bytes=vmem_limit,
            ),
            cost_estimate=cost,
        )(x, prepped["w1"], prepped["b1"], prepped["w2"], prepped["b2"],
          prepped["w3"], prepped["b3"])

    try:
        return call(True)       # single-buffered resident weights (halved VMEM)
    except Exception:
        return call(False)      # fallback: default (double-buffered) pipelining


def init_params(key, in_dim):
    """Deterministic synthetic init (PyTorch-Linear-style uniform bounds)."""
    ks = jax.random.split(key, 6)
    bound = 1.0 / jnp.sqrt(in_dim)

    def u(k, shape):
        return jax.random.uniform(k, shape, jnp.float32, minval=-bound, maxval=bound)

    return {
        "w1": u(ks[0], (in_dim, in_dim)),
        "b1": u(ks[1], (1, in_dim)),
        "w2": u(ks[2], (in_dim, in_dim)),
        "b2": u(ks[3], (1, in_dim)),
        "w3": u(ks[4], (in_dim, 1)),
        "b3": u(ks[5], (1, 1)),
    }


def reference_forward(x, p):
    h = jnp.maximum(x @ p["w1"] + p["b1"], 0.0)
    h = jnp.maximum(h @ p["w2"] + p["b2"], 0.0)
    return jax.nn.sigmoid(h @ p["w3"] + p["b3"])


if __name__ == "__main__":
    key = jax.random.PRNGKey(0)
    k_x, k_x2, k_p = jax.random.split(key, 3)

    in_dim = 32
    params = init_params(k_p, in_dim)

    # f32 path (exact semantics of the PyTorch module).
    prepped_f32 = prepare_params(params, stream_dtype=jnp.float32)

    # Small shape (single grid step).
    batch = 8
    x = jax.random.normal(k_x, (batch, in_dim), jnp.float32)
    score = jax.block_until_ready(rl_forward(x, prepped_f32))
    ref = reference_forward(x, params)
    assert score.shape == (batch, 1)
    assert jnp.allclose(score, ref, atol=1e-5, rtol=1e-5)

    # Multi-tile, non-multiple-of-tile batch (exercises the grid, the ragged
    # final block and the parallel axis).
    batch2 = 300
    x2 = jax.random.normal(k_x2, (batch2, in_dim), jnp.float32)
    score2 = jax.block_until_ready(rl_forward(x2, prepped_f32))
    ref2 = reference_forward(x2, params)
    assert score2.shape == (batch2, 1)
    assert jnp.allclose(score2, ref2, atol=1e-5, rtol=1e-5)

    # bf16-streamed path (mem-bound-regime optimization; looser tolerance).
    prepped_bf16 = prepare_params(params, stream_dtype=jnp.bfloat16)
    score3 = jax.block_until_ready(rl_forward(x2, prepped_bf16))
    assert score3.shape == (batch2, 1)
    assert jnp.allclose(score3, ref2, atol=3e-2, rtol=5e-2)

    print("KERNEL_OK")
</pallas_src>

<mosaic_0001>
module attributes {stable_mosaic.version = 11 : i64} {
  func.func @rl_mlp_kernel(%arg0: i32, %arg1: memref<8x32xf32, #tpu.memory_space<vmem>>, %arg2: memref<32x128xf32, #tpu.memory_space<vmem>>, %arg3: memref<1x128xf32, #tpu.memory_space<vmem>>, %arg4: memref<128x128xf32, #tpu.memory_space<vmem>>, %arg5: memref<1x128xf32, #tpu.memory_space<vmem>>, %arg6: memref<1x128xf32, #tpu.memory_space<vmem>>, %arg7: memref<1x1xf32, #tpu.memory_space<smem>>, %arg8: memref<8x1xf32, #tpu.memory_space<vmem>>) attributes {dimension_semantics = [#tpu.dimension_semantics<parallel>], iteration_bounds = array<i64: 1>, scalar_prefetch = 0 : i64, scratch_operands = 0 : i64, tpu.core_type = #tpu.core_type<tc>, window_params = [{transform_indices = @transform_0, window_bounds = array<i64: 8, 32>}, {pipeline_mode = #tpu.pipeline_mode<synchronous>, transform_indices = @transform_1, window_bounds = array<i64: 32, 128>}, {pipeline_mode = #tpu.pipeline_mode<synchronous>, transform_indices = @transform_2, window_bounds = array<i64: 1, 128>}, {pipeline_mode = #tpu.pipeline_mode<synchronous>, transform_indices = @transform_3, window_bounds = array<i64: 128, 128>}, {pipeline_mode = #tpu.pipeline_mode<synchronous>, transform_indices = @transform_4, window_bounds = array<i64: 1, 128>}, {pipeline_mode = #tpu.pipeline_mode<synchronous>, transform_indices = @transform_5, window_bounds = array<i64: 1, 128>}, {transform_indices = @transform_6, window_bounds = array<i64: 1, 1>}, {transform_indices = @transform_7, window_bounds = array<i64: 8, 1>}]} {
    %c0 = arith.constant 0 : index
    %c0_0 = arith.constant 0 : index
    %0 = vector.load %arg1[%c0, %c0_0] : memref<8x32xf32, #tpu.memory_space<vmem>>, vector<8x32xf32>
    %c0_1 = arith.constant 0 : index
    %c0_2 = arith.constant 0 : index
    %1 = vector.load %arg2[%c0_1, %c0_2] : memref<32x128xf32, #tpu.memory_space<vmem>>, vector<32x128xf32>
    %cst = arith.constant dense<0.000000e+00> : vector<8x128xf32>
    %2 = tpu.matmul %0, %1, %cst {dimension_numbers = #tpu.dot_dimension_numbers<[1], [0], [0], [1], [0, 0, 1, 1], [], []>} : vector<8x32xf32>, vector<32x128xf32>, vector<8x128xf32> -> vector<8x128xf32>
    %c0_3 = arith.constant 0 : index
    %c0_4 = arith.constant 0 : index
    %3 = vector.load %arg3[%c0_3, %c0_4] : memref<1x128xf32, #tpu.memory_space<vmem>>, vector<1x128xf32>
    %4 = vector.broadcast %3 : vector<1x128xf32> to vector<8x128xf32>
    %5 = arith.addf %2, %4 : vector<8x128xf32>
    %cst_5 = arith.constant 0.000000e+00 : f32
    %6 = vector.broadcast %cst_5 : f32 to vector<8x128xf32>
    %7 = arith.maximumf %5, %6 : vector<8x128xf32>
    %c0_6 = arith.constant 0 : index
    %c0_7 = arith.constant 0 : index
    %8 = vector.load %arg4[%c0_6, %c0_7] : memref<128x128xf32, #tpu.memory_space<vmem>>, vector<128x128xf32>
    %cst_8 = arith.constant dense<0.000000e+00> : vector<8x128xf32>
    %9 = tpu.matmul %7, %8, %cst_8 {dimension_numbers = #tpu.dot_dimension_numbers<[1], [0], [0], [1], [0, 0, 1, 1], [], []>} : vector<8x128xf32>, vector<128x128xf32>, vector<8x128xf32> -> vector<8x128xf32>
    %c0_9 = arith.constant 0 : index
    %c0_10 = arith.constant 0 : index
    %10 = vector.load %arg5[%c0_9, %c0_10] : memref<1x128xf32, #tpu.memory_space<vmem>>, vector<1x128xf32>
    %11 = vector.broadcast %10 : vector<1x128xf32> to vector<8x128xf32>
    %12 = arith.addf %9, %11 : vector<8x128xf32>
    %cst_11 = arith.constant 0.000000e+00 : f32
    %13 = vector.broadcast %cst_11 : f32 to vector<8x128xf32>
    %14 = arith.maximumf %12, %13 : vector<8x128xf32>
    %c0_12 = arith.constant 0 : index
    %c0_13 = arith.constant 0 : index
    %15 = vector.load %arg6[%c0_12, %c0_13] : memref<1x128xf32, #tpu.memory_space<vmem>>, vector<1x128xf32>
    %16 = vector.broadcast %15 : vector<1x128xf32> to vector<8x128xf32>
    %17 = arith.mulf %14, %16 : vector<8x128xf32>
    %cst_14 = arith.constant dense<0.000000e+00> : vector<8xf32>
    %18 = vector.multi_reduction <add>, %17, %cst_14 [1] : vector<8x128xf32> to vector<8xf32>
    %19 = vector.shape_cast %18 : vector<8xf32> to vector<8x1xf32>
    %c0_15 = arith.constant 0 : index
    %c0_16 = arith.constant 0 : index
    %20 = memref.load %arg7[%c0_15, %c0_16] : memref<1x1xf32, #tpu.memory_space<smem>>
    %21 = vector.broadcast %20 : f32 to vector<8x1xf32>
    %22 = arith.addf %19, %21 : vector<8x1xf32>
    %23 = arith.negf %22 : vector<8x1xf32>
    %24 = math.exp %23 : vector<8x1xf32>
    %cst_17 = arith.constant 1.000000e+00 : f32
    %25 = vector.broadcast %cst_17 : f32 to vector<8x1xf32>
    %26 = arith.addf %25, %24 : vector<8x1xf32>
    %27 = arith.divf %25, %26 : vector<8x1xf32>
    %c0_18 = arith.constant 0 : index
    %c0_19 = arith.constant 0 : index
    %28 = vector.load %arg8[%c0_18, %c0_19] : memref<8x1xf32, #tpu.memory_space<vmem>>, vector<8x1xf32>
    tpu.vector_store %arg8[%c0_18, %c0_19], %27 {strides = array<i32>} : memref<8x1xf32, #tpu.memory_space<vmem>>, vector<8x1xf32>,
    return
  }
  func.func @transform_0(%arg0: i32) -> (i32, i32) {
    %c0_i32 = arith.constant 0 : i32
    %c0_i32_0 = arith.constant 0 : i32
    return %arg0, %c0_i32 : i32, i32
  }
  func.func @transform_1(%arg0: i32) -> (i32, i32) {
    %c0_i32 = arith.constant 0 : i32
    %c0_i32_0 = arith.constant 0 : i32
    %c0_i32_1 = arith.constant 0 : i32
    return %c0_i32, %c0_i32_0 : i32, i32
  }
  func.func @transform_2(%arg0: i32) -> (i32, i32) {
    %c0_i32 = arith.constant 0 : i32
    %c0_i32_0 = arith.constant 0 : i32
    %c0_i32_1 = arith.constant 0 : i32
    return %c0_i32, %c0_i32_0 : i32, i32
  }
  func.func @transform_3(%arg0: i32) -> (i32, i32) {
    %c0_i32 = arith.constant 0 : i32
    %c0_i32_0 = arith.constant 0 : i32
    %c0_i32_1 = arith.constant 0 : i32
    return %c0_i32, %c0_i32_0 : i32, i32
  }
  func.func @transform_4(%arg0: i32) -> (i32, i32) {
    %c0_i32 = arith.constant 0 : i32
    %c0_i32_0 = arith.constant 0 : i32
    %c0_i32_1 = arith.constant 0 : i32
    return %c0_i32, %c0_i32_0 : i32, i32
  }
  func.func @transform_5(%arg0: i32) -> (i32, i32) {
    %c0_i32 = arith.constant 0 : i32
    %c0_i32_0 = arith.constant 0 : i32
    %c0_i32_1 = arith.constant 0 : i32
    return %c0_i32, %c0_i32_0 : i32, i32
  }
  func.func @transform_6(%arg0: i32) -> (i32, i32) {
    %c0_i32 = arith.constant 0 : i32
    %c0_i32_0 = arith.constant 0 : i32
    %c0_i32_1 = arith.constant 0 : i32
    return %c0_i32, %c0_i32_0 : i32, i32
  }
  func.func @transform_7(%arg0: i32) -> (i32, i32) {
    %c0_i32 = arith.constant 0 : i32
    %c0_i32_0 = arith.constant 0 : i32
    return %arg0, %c0_i32 : i32, i32
  }
}

module attributes {stable_mosaic.version = 11 : i64} {
  func.func @rl_mlp_kernel(%arg0: i32, %arg1: memref<8x32xf32, #tpu.memory_space<vmem>>, %arg2: memref<32x128xf32, #tpu.memory_space<vmem>>, %arg3: memref<1x128xf32, #tpu.memory_space<vmem>>, %arg4: memref<128x128xf32, #tpu.memory_space<vmem>>, %arg5: memref<1x128xf32, #tpu.memory_space<vmem>>, %arg6: memref<1x128xf32, #tpu.memory_space<vmem>>, %arg7: memref<1x1xf32, #tpu.memory_space<smem>>, %arg8: memref<8x1xf32, #tpu.memory_space<vmem>>) attributes {dimension_semantics = [#tpu.dimension_semantics<parallel>], iteration_bounds = array<i64: 1>, scalar_prefetch = 0 : i64, scratch_operands = 0 : i64, tpu.core_type = #tpu.core_type<tc>, window_params = [{transform_indices = @transform_0, window_bounds = array<i64: 8, 32>}, {pipeline_mode = #tpu.pipeline_mode<synchronous>, transform_indices = @transform_1, window_bounds = array<i64: 32, 128>}, {pipeline_mode = #tpu.pipeline_mode<synchronous>, transform_indices = @transform_2, window_bounds = array<i64: 1, 128>}, {pipeline_mode = #tpu.pipeline_mode<synchronous>, transform_indices = @transform_3, window_bounds = array<i64: 128, 128>}, {pipeline_mode = #tpu.pipeline_mode<synchronous>, transform_indices = @transform_4, window_bounds = array<i64: 1, 128>}, {pipeline_mode = #tpu.pipeline_mode<synchronous>, transform_indices = @transform_5, window_bounds = array<i64: 1, 128>}, {transform_indices = @transform_6, window_bounds = array<i64: 1, 1>}, {transform_indices = @transform_7, window_bounds = array<i64: 8, 1>}]} {
    %c0 = arith.constant 0 : index
    %c0_0 = arith.constant 0 : index
    %0 = vector.load %arg1[%c0, %c0_0] : memref<8x32xf32, #tpu.memory_space<vmem>>, vector<8x32xf32>
    %c0_1 = arith.constant 0 : index
    %c0_2 = arith.constant 0 : index
    %1 = vector.load %arg2[%c0_1, %c0_2] : memref<32x128xf32, #tpu.memory_space<vmem>>, vector<32x128xf32>
    %cst = arith.constant dense<0.000000e+00> : vector<8x128xf32>
    %2 = tpu.matmul %0, %1, %cst {dimension_numbers = #tpu.dot_dimension_numbers<[1], [0], [0], [1], [0, 0, 1, 1], [], []>} : vector<8x32xf32>, vector<32x128xf32>, vector<8x128xf32> -> vector<8x128xf32>
    %c0_3 = arith.constant 0 : index
    %c0_4 = arith.constant 0 : index
    %3 = vector.load %arg3[%c0_3, %c0_4] : memref<1x128xf32, #tpu.memory_space<vmem>>, vector<1x128xf32>
    %4 = vector.broadcast %3 : vector<1x128xf32> to vector<8x128xf32>
    %5 = arith.addf %2, %4 : vector<8x128xf32>
    %cst_5 = arith.constant 0.000000e+00 : f32
    %6 = vector.broadcast %cst_5 : f32 to vector<8x128xf32>
    %7 = arith.maximumf %5, %6 : vector<8x128xf32>
    %c0_6 = arith.constant 0 : index
    %c0_7 = arith.constant 0 : index
    %8 = vector.load %arg4[%c0_6, %c0_7] : memref<128x128xf32, #tpu.memory_space<vmem>>, vector<128x128xf32>
    %cst_8 = arith.constant dense<0.000000e+00> : vector<8x128xf32>
    %9 = tpu.matmul %7, %8, %cst_8 {dimension_numbers = #tpu.dot_dimension_numbers<[1], [0], [0], [1], [0, 0, 1, 1], [], []>} : vector<8x128xf32>, vector<128x128xf32>, vector<8x128xf32> -> vector<8x128xf32>
    %c0_9 = arith.constant 0 : index
    %c0_10 = arith.constant 0 : index
    %10 = vector.load %arg5[%c0_9, %c0_10] : memref<1x128xf32, #tpu.memory_space<vmem>>, vector<1x128xf32>
    %11 = vector.broadcast %10 : vector<1x128xf32> to vector<8x128xf32>
    %12 = arith.addf %9, %11 : vector<8x128xf32>
    %cst_11 = arith.constant 0.000000e+00 : f32
    %13 = vector.broadcast %cst_11 : f32 to vector<8x128xf32>
    %14 = arith.maximumf %12, %13 : vector<8x128xf32>
    %c0_12 = arith.constant 0 : index
    %c0_13 = arith.constant 0 : index
    %15 = vector.load %arg6[%c0_12, %c0_13] : memref<1x128xf32, #tpu.memory_space<vmem>>, vector<1x128xf32>
    %16 = vector.broadcast %15 : vector<1x128xf32> to vector<8x128xf32>
    %17 = arith.mulf %14, %16 : vector<8x128xf32>
    %cst_14 = arith.constant dense<0.000000e+00> : vector<8xf32>
    %18 = vector.multi_reduction <add>, %17, %cst_14 [1] : vector<8x128xf32> to vector<8xf32>
    %19 = vector.shape_cast %18 : vector<8xf32> to vector<8x1xf32>
    %c0_15 = arith.constant 0 : index
    %c0_16 = arith.constant 0 : index
    %20 = memref.load %arg7[%c0_15, %c0_16] : memref<1x1xf32, #tpu.memory_space<smem>>
    %21 = vector.broadcast %20 : f32 to vector<8x1xf32>
    %22 = arith.addf %19, %21 : vector<8x1xf32>
    %23 = arith.negf %22 : vector<8x1xf32>
    %24 = math.exp %23 : vector<8x1xf32>
    %cst_17 = arith.constant 1.000000e+00 : f32
    %25 = vector.broadcast %cst_17 : f32 to vector<8x1xf32>
    %26 = arith.addf %25, %24 : vector<8x1xf32>
    %27 = arith.divf %25, %26 : vector<8x1xf32>
    %c0_18 = arith.constant 0 : index
    %c0_19 = arith.constant 0 : index
    %28 = vector.load %arg8[%c0_18, %c0_19] : memref<8x1xf32, #tpu.memory_space<vmem>>, vector<8x1xf32>
    tpu.vector_store %arg8[%c0_18, %c0_19], %27 {strides = array<i32>} : memref<8x1xf32, #tpu.memory_space<vmem>>, vector<8x1xf32>,
    return
  }
  func.func @transform_0(%arg0: i32) -> (i32, i32) {
    %c0_i32 = arith.constant 0 : i32
    %c0_i32_0 = arith.constant 0 : i32
    return %arg0, %c0_i32 : i32, i32
  }
  func.func @transform_1(%arg0: i32) -> (i32, i32) {
    %c0_i32 = arith.constant 0 : i32
    %c0_i32_0 = arith.constant 0 : i32
    %c0_i32_1 = arith.constant 0 : i32
    return %c0_i32, %c0_i32_0 : i32, i32
  }
  func.func @transform_2(%arg0: i32) -> (i32, i32) {
    %c0_i32 = arith.constant 0 : i32
    %c0_i32_0 = arith.constant 0 : i32
    %c0_i32_1 = arith.constant 0 : i32
    return %c0_i32, %c0_i32_0 : i32, i32
  }
  func.func @transform_3(%arg0: i32) -> (i32, i32) {
    %c0_i32 = arith.constant 0 : i32
    %c0_i32_0 = arith.constant 0 : i32
    %c0_i32_1 = arith.constant 0 : i32
    return %c0_i32, %c0_i32_0 : i32, i32
  }
  func.func @transform_4(%arg0: i32) -> (i32, i32) {
    %c0_i32 = arith.constant 0 : i32
    %c0_i32_0 = arith.constant 0 : i32
    %c0_i32_1 = arith.constant 0 : i32
    return %c0_i32, %c0_i32_0 : i32, i32
  }
  func.func @transform_5(%arg0: i32) -> (i32, i32) {
    %c0_i32 = arith.constant 0 : i32
    %c0_i32_0 = arith.constant 0 : i32
    %c0_i32_1 = arith.constant 0 : i32
    return %c0_i32, %c0_i32_0 : i32, i32
  }
  func.func @transform_6(%arg0: i32) -> (i32, i32) {
    %c0_i32 = arith.constant 0 : i32
    %c0_i32_0 = arith.constant 0 : i32
    %c0_i32_1 = arith.constant 0 : i32
    return %c0_i32, %c0_i32_0 : i32, i32
  }
  func.func @transform_7(%arg0: i32) -> (i32, i32) {
    %c0_i32 = arith.constant 0 : i32
    %c0_i32_0 = arith.constant 0 : i32
    return %arg0, %c0_i32 : i32, i32
  }
}

</mosaic_0001>

<llo_original>
// kernel: tpu_custom_call.1
$region0: #{tpu_custom_call.1}
  #allocation0 [shape = 'u32[]', space=smem, size = 0x4, offset = 0x4, fixed_abs, tag = 'smem constant byte address 0x4 - core index']
  #allocation1 [shape = 'u32[72,128]{1,0:T(1,128)}', space=vmem, size = 0x9000, scoped, tag = 'internal scratch']
  #allocation2 [shape = 'f32[1,1]{1,0:T(1,128)S(6)}', space=smem, size = 0x200, scoped, tag = 'scoped memory for tpu_custom_call.1']
  %s0 = inlined_call_operand.hbm [shape: f32[8,32], index: 0, kind: input, shape index: {}]
  %s1 = inlined_call_operand.hbm [shape: f32[32,128], index: 1, kind: input, shape index: {}]
  %s2 = inlined_call_operand.vmem [shape: f32[1,128], index: 2, kind: input, shape index: {}]
  %s3 = inlined_call_operand.hbm [shape: f32[128,128], index: 3, kind: input, shape index: {}]
  %s4 = inlined_call_operand.vmem [shape: f32[1,128], index: 4, kind: input, shape index: {}]
  %s5 = inlined_call_operand.vmem [shape: f32[1,128], index: 5, kind: input, shape index: {}]
  %s6 = inlined_call_operand.<no memory space> [shape: f32[1,1], index: 6, kind: input, shape index: {}]
  %s7 = inlined_call_operand.vmem [shape: f32[8,1], index: 7, kind: output, shape index: {}]
  %s8 = sld [smem:[#allocation0]]
  $region50: #{tpu_custom_call.1} parent=0
    _
  %s10 = ssub.s32 1, %s8
  %s11 = scalar_select 0, %s10, %s8
  %12 = sst [smem:[#allocation2]] %s6
  $region1: #{tpu_custom_call.1} parent=0
    #allocation3 [shape = 'u8[4096]{0}', space=vmem, size = 0x1000, scoped, tag = 'input window, operand 0, single buffered']
    #allocation4 [shape = 's32[1]{0}', space=sflag, size = 0x4, scoped, tag = 'scoped memory for tpu_custom_call.1']
    #allocation5 [shape = 'u8[16384]{0}', space=vmem, size = 0x4000, scoped, tag = 'input window, operand 1, single buffered']
    #allocation6 [shape = 's32[1]{0}', space=sflag, size = 0x4, scoped, tag = 'scoped memory for tpu_custom_call.1']
    #allocation7 [shape = 'u8[65536]{0}', space=vmem, size = 0x10000, scoped, tag = 'input window, operand 3, single buffered']
    %13 = vsyncpa [#allocation4], 0
    %14 = vsyncpa [#allocation6], 0
    // Predicated region
    $region2: #{tpu_custom_call.1} parent=1 // pred_check
      _
    $region3: #{tpu_custom_call.1} parent=1 // pred_check_branch
      %16 = sbr.rel (0) target = $region5
    $region4: #{tpu_custom_call.1} parent=1 // pred_region
      %18 = vsyncadd [#allocation4], 0
      %s20 = sshll.u32 %s0, 4
      %s21 = int_to_ptr.hbm [resolvable:$true] %s20
      %s22 = sshll.u32 [#allocation3], 4
      %s23 = int_to_ptr.vmem [resolvable:$true] %s22
      %25 = dma.hbm_to_vmem [thread:$0]  %s21, 128, %s23, [#allocation4]
    $region5: #{tpu_custom_call.1} parent=1 // pred_fallthru
      _
    // Predicated region
    $region6: #{tpu_custom_call.1} parent=1 // pred_check
      _
    $region7: #{tpu_custom_call.1} parent=1 // pred_check_branch
      %27 = sbr.rel (0) target = $region9
    $region8: #{tpu_custom_call.1} parent=1 // pred_region
      %29 = vsyncadd [#allocation6], 0
      %s30 = sshll.u32 %s1, 4
      %s31 = int_to_ptr.hbm [resolvable:$true] %s30
      %s32 = sshll.u32 [#allocation5], 4
      %s33 = int_to_ptr.vmem [resolvable:$true] %s32
      %38 = dma.hbm_to_vmem [thread:$0]  %s31, 512, %s33, [#allocation6], 128, 128, 8
    $region9: #{tpu_custom_call.1} parent=1 // pred_fallthru
      _
    // Predicated region
    $region10: #{tpu_custom_call.1} parent=1 // pred_check
      _
    $region11: #{tpu_custom_call.1} parent=1 // pred_check_branch
      %40 = sbr.rel (0) target = $region13
    $region12: #{tpu_custom_call.1} parent=1 // pred_region
      _
    $region13: #{tpu_custom_call.1} parent=1 // pred_fallthru
      _
    // Predicated region
    $region14: #{tpu_custom_call.1} parent=1 // pred_check
      _
    $region15: #{tpu_custom_call.1} parent=1 // pred_check_branch
      %42 = sbr.rel (0) target = $region17
    $region16: #{tpu_custom_call.1} parent=1 // pred_region
      %44 = vsyncadd [#allocation6], 0
      %s45 = sshll.u32 %s3, 4
      %s46 = int_to_ptr.hbm [resolvable:$true] %s45
      %s47 = sshll.u32 [#allocation7], 4
      %s48 = int_to_ptr.vmem [resolvable:$true] %s47
      %53 = dma.hbm_to_vmem [thread:$0]  %s46, 2048, %s48, [#allocation6], 128, 128, 8
    $region17: #{tpu_custom_call.1} parent=1 // pred_fallthru
      _
    // Predicated region
    $region18: #{tpu_custom_call.1} parent=1 // pred_check
      _
    $region19: #{tpu_custom_call.1} parent=1 // pred_check_branch
      %55 = sbr.rel (0) target = $region21
    $region20: #{tpu_custom_call.1} parent=1 // pred_region
      _
    $region21: #{tpu_custom_call.1} parent=1 // pred_fallthru
      _
    // Predicated region
    $region22: #{tpu_custom_call.1} parent=1 // pred_check
      _
    $region23: #{tpu_custom_call.1} parent=1 // pred_check_branch
      %57 = sbr.rel (0) target = $region25
    $region24: #{tpu_custom_call.1} parent=1 // pred_region
      _
    $region25: #{tpu_custom_call.1} parent=1 // pred_fallthru
      _
    // Predicated region
    $region26: #{tpu_custom_call.1} parent=1 // pred_check
      _
    $region27: #{tpu_custom_call.1} parent=1 // pred_check_branch
      %59 = sbr.rel (0) target = $region29
    $region28: #{tpu_custom_call.1} parent=1 // pred_region
      _
    $region29: #{tpu_custom_call.1} parent=1 // pred_fallthru
      _
    // Predicated region
    $region30: #{tpu_custom_call.1} parent=1 // pred_check
      _
    $region31: #{tpu_custom_call.1} parent=1 // pred_check_branch
      %61 = sbr.rel (0) target = $region33
    $region32: #{tpu_custom_call.1} parent=1 // pred_region
      %63 = dma.done [#allocation4], 128
    $region33: #{tpu_custom_call.1} parent=1 // pred_fallthru
      _
    // Predicated region
    $region34: #{tpu_custom_call.1} parent=1 // pred_check
      _
    $region35: #{tpu_custom_call.1} parent=1 // pred_check_branch
      %65 = sbr.rel (0) target = $region37
    $region36: #{tpu_custom_call.1} parent=1 // pred_region
      %67 = dma.done [#allocation6], 512
    $region37: #{tpu_custom_call.1} parent=1 // pred_fallthru
      _
    // Predicated region
    $region38: #{tpu_custom_call.1} parent=1 // pred_check
      _
    $region39: #{tpu_custom_call.1} parent=1 // pred_check_branch
      %69 = sbr.rel (0) target = $region41
    $region40: #{tpu_custom_call.1} parent=1 // pred_region
      %71 = dma.done [#allocation6], 2048
    $region41: #{tpu_custom_call.1} parent=1 // pred_fallthru
      _
    %v72 = vld [vmem:[#allocation3] sm:$0xff]
    %v73 = vld [vmem:[#allocation5] sm:$0xff]
    %v74 = vld [vmem:[#allocation5 + $0x8] sm:$0xff]
    %v75 = vld [vmem:[#allocation5 + $0x10] sm:$0xff]
    %v76 = vld [vmem:[#allocation5 + $0x18] sm:$0xff]
    %v77 = vld [vmem:[%s2] sm:$0x1]
    %v79 = vperm.slane %v77, 0
    %vm81 = vcmask 261120
    %v83 = vsel %vm81, %v72, 0
    %85 = vmatpush.msra.mxu0 0.0
    %86 = vmatpush.msra.mxu0 0.0
    %87 = vmatpush.msra.mxu0 0.0
    %88 = vmatpush.msra.mxu0 0.0
    %89 = vmatpush.msra.mxu0 0.0
    %90 = vmatpush.msra.mxu0 0.0
    %91 = vmatpush.msra.mxu0 0.0
    %92 = vmatpush.msra.mxu0 0.0
    %93 = vmatpush.msra.mxu0 0.0
    %94 = vmatpush.msra.mxu0 0.0
    %95 = vmatpush.msra.mxu0 0.0
    %96 = vmatpush.msra.mxu0 0.0
    %97 = vmatpush.msra.mxu0 %v76
    %98 = vmatpush.msra.mxu0 %v75
    %99 = vmatpush.msra.mxu0 %v74
    %100 = vmatpush.msra.mxu0 %v73
    %101 = vmatmul.f32.gmra.mxu0 %v83
    %v102 = vpop.f32.mrf.mxu0
    %v103 = vadd.f32 %v79, %v102
    %104 = vdwg.mxu0
    %v105 = vmax.f32 %v103, 0.0
    %v106 = vld [vmem:[#allocation7] sm:$0xff]
    %v107 = vld [vmem:[#allocation7 + $0x8] sm:$0xff]
    %v108 = vld [vmem:[#allocation7 + $0x10] sm:$0xff]
    %v109 = vld [vmem:[#allocation7 + $0x18] sm:$0xff]
    %v110 = vld [vmem:[#allocation7 + $0x20] sm:$0xff]
    %v111 = vld [vmem:[#allocation7 + $0x28] sm:$0xff]
    %v112 = vld [vmem:[#allocation7 + $0x30] sm:$0xff]
    %v113 = vld [vmem:[#allocation7 + $0x38] sm:$0xff]
    %v114 = vld [vmem:[#allocation7 + $0x40] sm:$0xff]
    %v115 = vld [vmem:[#allocation7 + $0x48] sm:$0xff]
    %v116 = vld [vmem:[#allocation7 + $0x50] sm:$0xff]
    %v117 = vld [vmem:[#allocation7 + $0x58] sm:$0xff]
    %v118 = vld [vmem:[#allocation7 + $0x60] sm:$0xff]
    %v119 = vld [vmem:[#allocation7 + $0x68] sm:$0xff]
    %v120 = vld [vmem:[#allocation7 + $0x70] sm:$0xff]
    %v121 = vld [vmem:[#allocation7 + $0x78] sm:$0xff]
    %v122 = vld [vmem:[%s4] sm:$0x1]
    %v124 = vperm.slane %v122, 0
    %126 = vmatpush.msra.mxu0 %v121
    %127 = vmatpush.msra.mxu0 %v120
    %128 = vmatpush.msra.mxu0 %v119
    %129 = vmatpush.msra.mxu0 %v118
    %130 = vmatpush.msra.mxu0 %v117
    %131 = vmatpush.msra.mxu0 %v116
    %132 = vmatpush.msra.mxu0 %v115
    %133 = vmatpush.msra.mxu0 %v114
    %134 = vmatpush.msra.mxu0 %v113
    %135 = vmatpush.msra.mxu0 %v112
    %136 = vmatpush.msra.mxu0 %v111
    %137 = vmatpush.msra.mxu0 %v110
    %138 = vmatpush.msra.mxu0 %v109
    %139 = vmatpush.msra.mxu0 %v108
    %140 = vmatpush.msra.mxu0 %v107
    %141 = vmatpush.msra.mxu0 %v106
    %142 = vmatmul.f32.gmra.mxu0 %v105
    %v143 = vpop.f32.mrf.mxu0
    %v144 = vadd.f32 %v124, %v143
    %145 = vdwg.mxu0
    %v146 = vmax.f32 %v144, 0.0
    %v147 = vld [vmem:[%s5] sm:$0x1]
    %v149 = vperm.slane %v147, 0
    %v151 = vmul.f32 %v146, %v149
    %152 = vadd.xlane.f32.xlu0 %v151
    %v153 = vpop.xlane.xlu0 %152
    %s154 = sld [smem:[#allocation2]]
    %v155 = vstv %s154
    %v156 = vadd.f32 %v153, %v155
    %v157 = vxor.u32 %v156, 2147483648
    %v158 = vmul.f32 %v157, 1.442695
    %v159 = vpow.pop %v158
    %v160 = vadd.f32 %v159, 1.0
    %v161 = vrcp.pop %v160
    %v162 = vmul.f32 %v160, %v161
    %v163 = vsub.f32 1.0, %v162
    %v164 = vmul.f32 %v161, %v163
    %v165 = vadd.f32 %v161, %v164
    %vm166 = vweird.f32 %v160
    %vm167 = vweird.f32 %v161
    %vm168 = vmor %vm166, %vm167
    %v169 = vsel %vm168, %v161, %v165
    %v170 = vand.u32 2147483647, %v160
    %vm171 = vcmp.eq.f32.partialorder %v170, 8.507059e+37
    %v172 = vand.u32 %v160, 2147483648
    %v173 = vor.u32 1.1754944e-38, %v172
    %v174 = vsel %vm171, %v173, %v169
    %v175 = vmul.f32 1.0, %v174
    %vm176 = vcmask 7168
    %177 = vst.msk [vmem:[%s7] sm:$0xff] %vm176, %v175
    // Predicated region
    $region42: #{tpu_custom_call.1} parent=1 // pred_check
      _
    $region43: #{tpu_custom_call.1} parent=1 // pred_check_branch
      %179 = sbr.rel (0) target = $region45
    $region44: #{tpu_custom_call.1} parent=1 // pred_region
      _
    $region45: #{tpu_custom_call.1} parent=1 // pred_fallthru
      _
    // Predicated region
    $region46: #{tpu_custom_call.1} parent=1 // pred_check
      _
    $region47: #{tpu_custom_call.1} parent=1 // pred_check_branch
      %181 = sbr.rel (0) target = $region49
    $region48: #{tpu_custom_call.1} parent=1 // pred_region
      _
    $region49: #{tpu_custom_call.1} parent=1 // pred_fallthru
      _
    %182 = vsyncpa [#allocation4], 1
    %183 = vsyncpa [#allocation6], 1

// kernel: tpu_custom_call.1
$region0: #{tpu_custom_call.1}
  #allocation0 [shape = 'u32[]', space=smem, size = 0x4, offset = 0x4, fixed_abs, tag = 'smem constant byte address 0x4 - core index']
  #allocation1 [shape = 'u32[72,128]{1,0:T(1,128)}', space=vmem, size = 0x9000, scoped, tag = 'internal scratch']
  #allocation2 [shape = 'f32[1,1]{1,0:T(1,128)S(6)}', space=smem, size = 0x200, scoped, tag = 'scoped memory for tpu_custom_call.1']
  %s0 = inlined_call_operand.hbm [shape: f32[8,32], index: 0, kind: input, shape index: {}]
  %s1 = inlined_call_operand.hbm [shape: f32[32,128], index: 1, kind: input, shape index: {}]
  %s2 = inlined_call_operand.vmem [shape: f32[1,128], index: 2, kind: input, shape index: {}]
  %s3 = inlined_call_operand.hbm [shape: f32[128,128], index: 3, kind: input, shape index: {}]
  %s4 = inlined_call_operand.vmem [shape: f32[1,128], index: 4, kind: input, shape index: {}]
  %s5 = inlined_call_operand.vmem [shape: f32[1,128], index: 5, kind: input, shape index: {}]
  %s6 = inlined_call_operand.<no memory space> [shape: f32[1,1], index: 6, kind: input, shape index: {}]
  %s7 = inlined_call_operand.vmem [shape: f32[8,1], index: 7, kind: output, shape index: {}]
  %s8 = sld [smem:[#allocation0]]
  $region50: #{tpu_custom_call.1} parent=0
    _
  %s10 = ssub.s32 1, %s8
  %s11 = scalar_select 0, %s10, %s8
  %12 = sst [smem:[#allocation2]] %s6
  $region1: #{tpu_custom_call.1} parent=0
    #allocation3 [shape = 'u8[4096]{0}', space=vmem, size = 0x1000, scoped, tag = 'input window, operand 0, single buffered']
    #allocation4 [shape = 's32[1]{0}', space=sflag, size = 0x4, scoped, tag = 'scoped memory for tpu_custom_call.1']
    #allocation5 [shape = 'u8[16384]{0}', space=vmem, size = 0x4000, scoped, tag = 'input window, operand 1, single buffered']
    #allocation6 [shape = 's32[1]{0}', space=sflag, size = 0x4, scoped, tag = 'scoped memory for tpu_custom_call.1']
    #allocation7 [shape = 'u8[65536]{0}', space=vmem, size = 0x10000, scoped, tag = 'input window, operand 3, single buffered']
    %13 = vsyncpa [#allocation4], 0
    %14 = vsyncpa [#allocation6], 0
    // Predicated region
    $region2: #{tpu_custom_call.1} parent=1 // pred_check
      _
    $region3: #{tpu_custom_call.1} parent=1 // pred_check_branch
      %16 = sbr.rel (0) target = $region5
    $region4: #{tpu_custom_call.1} parent=1 // pred_region
      %18 = vsyncadd [#allocation4], 0
      %s20 = sshll.u32 %s0, 4
      %s21 = int_to_ptr.hbm [resolvable:$true] %s20
      %s22 = sshll.u32 [#allocation3], 4
      %s23 = int_to_ptr.vmem [resolvable:$true] %s22
      %25 = dma.hbm_to_vmem [thread:$0]  %s21, 128, %s23, [#allocation4]
    $region5: #{tpu_custom_call.1} parent=1 // pred_fallthru
      _
    // Predicated region
    $region6: #{tpu_custom_call.1} parent=1 // pred_check
      _
    $region7: #{tpu_custom_call.1} parent=1 // pred_check_branch
      %27 = sbr.rel (0) target = $region9
    $region8: #{tpu_custom_call.1} parent=1 // pred_region
      %29 = vsyncadd [#allocation6], 0
      %s30 = sshll.u32 %s1, 4
      %s31 = int_to_ptr.hbm [resolvable:$true] %s30
      %s32 = sshll.u32 [#allocation5], 4
      %s33 = int_to_ptr.vmem [resolvable:$true] %s32
      %38 = dma.hbm_to_vmem [thread:$0]  %s31, 512, %s33, [#allocation6], 128, 128, 8
    $region9: #{tpu_custom_call.1} parent=1 // pred_fallthru
      _
    // Predicated region
    $region10: #{tpu_custom_call.1} parent=1 // pred_check
      _
    $region11: #{tpu_custom_call.1} parent=1 // pred_check_branch
      %40 = sbr.rel (0) target = $region13
    $region12: #{tpu_custom_call.1} parent=1 // pred_region
      _
    $region13: #{tpu_custom_call.1} parent=1 // pred_fallthru
      _
    // Predicated region
    $region14: #{tpu_custom_call.1} parent=1 // pred_check
      _
    $region15: #{tpu_custom_call.1} parent=1 // pred_check_branch
      %42 = sbr.rel (0) target = $region17
    $region16: #{tpu_custom_call.1} parent=1 // pred_region
      %44 = vsyncadd [#allocation6], 0
      %s45 = sshll.u32 %s3, 4
      %s46 = int_to_ptr.hbm [resolvable:$true] %s45
      %s47 = sshll.u32 [#allocation7], 4
      %s48 = int_to_ptr.vmem [resolvable:$true] %s47
      %53 = dma.hbm_to_vmem [thread:$0]  %s46, 2048, %s48, [#allocation6], 128, 128, 8
    $region17: #{tpu_custom_call.1} parent=1 // pred_fallthru
      _
    // Predicated region
    $region18: #{tpu_custom_call.1} parent=1 // pred_check
      _
    $region19: #{tpu_custom_call.1} parent=1 // pred_check_branch
      %55 = sbr.rel (0) target = $region21
    $region20: #{tpu_custom_call.1} parent=1 // pred_region
      _
    $region21: #{tpu_custom_call.1} parent=1 // pred_fallthru
      _
    // Predicated region
    $region22: #{tpu_custom_call.1} parent=1 // pred_check
      _
    $region23: #{tpu_custom_call.1} parent=1 // pred_check_branch
      %57 = sbr.rel (0) target = $region25
    $region24: #{tpu_custom_call.1} parent=1 // pred_region
      _
    $region25: #{tpu_custom_call.1} parent=1 // pred_fallthru
      _
    // Predicated region
    $region26: #{tpu_custom_call.1} parent=1 // pred_check
      _
    $region27: #{tpu_custom_call.1} parent=1 // pred_check_branch
      %59 = sbr.rel (0) target = $region29
    $region28: #{tpu_custom_call.1} parent=1 // pred_region
      _
    $region29: #{tpu_custom_call.1} parent=1 // pred_fallthru
      _
    // Predicated region
    $region30: #{tpu_custom_call.1} parent=1 // pred_check
      _
    $region31: #{tpu_custom_call.1} parent=1 // pred_check_branch
      %61 = sbr.rel (0) target = $region33
    $region32: #{tpu_custom_call.1} parent=1 // pred_region
      %63 = dma.done [#allocation4], 128
    $region33: #{tpu_custom_call.1} parent=1 // pred_fallthru
      _
    // Predicated region
    $region34: #{tpu_custom_call.1} parent=1 // pred_check
      _
    $region35: #{tpu_custom_call.1} parent=1 // pred_check_branch
      %65 = sbr.rel (0) target = $region37
    $region36: #{tpu_custom_call.1} parent=1 // pred_region
      %67 = dma.done [#allocation6], 512
    $region37: #{tpu_custom_call.1} parent=1 // pred_fallthru
      _
    // Predicated region
    $region38: #{tpu_custom_call.1} parent=1 // pred_check
      _
    $region39: #{tpu_custom_call.1} parent=1 // pred_check_branch
      %69 = sbr.rel (0) target = $region41
    $region40: #{tpu_custom_call.1} parent=1 // pred_region
      %71 = dma.done [#allocation6], 2048
    $region41: #{tpu_custom_call.1} parent=1 // pred_fallthru
      _
    %v72 = vld [vmem:[#allocation3] sm:$0xff]
    %v73 = vld [vmem:[#allocation5] sm:$0xff]
    %v74 = vld [vmem:[#allocation5 + $0x8] sm:$0xff]
    %v75 = vld [vmem:[#allocation5 + $0x10] sm:$0xff]
    %v76 = vld [vmem:[#allocation5 + $0x18] sm:$0xff]
    %v77 = vld [vmem:[%s2] sm:$0x1]
    %v79 = vperm.slane %v77, 0
    %vm81 = vcmask 261120
    %v83 = vsel %vm81, %v72, 0
    %85 = vmatpush.msra.mxu0 0.0
    %86 = vmatpush.msra.mxu0 0.0
    %87 = vmatpush.msra.mxu0 0.0
    %88 = vmatpush.msra.mxu0 0.0
    %89 = vmatpush.msra.mxu0 0.0
    %90 = vmatpush.msra.mxu0 0.0
    %91 = vmatpush.msra.mxu0 0.0
    %92 = vmatpush.msra.mxu0 0.0
    %93 = vmatpush.msra.mxu0 0.0
    %94 = vmatpush.msra.mxu0 0.0
    %95 = vmatpush.msra.mxu0 0.0
    %96 = vmatpush.msra.mxu0 0.0
    %97 = vmatpush.msra.mxu0 %v76
    %98 = vmatpush.msra.mxu0 %v75
    %99 = vmatpush.msra.mxu0 %v74
    %100 = vmatpush.msra.mxu0 %v73
    %101 = vmatmul.f32.gmra.mxu0 %v83
    %v102 = vpop.f32.mrf.mxu0
    %v103 = vadd.f32 %v79, %v102
    %104 = vdwg.mxu0
    %v105 = vmax.f32 %v103, 0.0
    %v106 = vld [vmem:[#allocation7] sm:$0xff]
    %v107 = vld [vmem:[#allocation7 + $0x8] sm:$0xff]
    %v108 = vld [vmem:[#allocation7 + $0x10] sm:$0xff]
    %v109 = vld [vmem:[#allocation7 + $0x18] sm:$0xff]
    %v110 = vld [vmem:[#allocation7 + $0x20] sm:$0xff]
    %v111 = vld [vmem:[#allocation7 + $0x28] sm:$0xff]
    %v112 = vld [vmem:[#allocation7 + $0x30] sm:$0xff]
    %v113 = vld [vmem:[#allocation7 + $0x38] sm:$0xff]
    %v114 = vld [vmem:[#allocation7 + $0x40] sm:$0xff]
    %v115 = vld [vmem:[#allocation7 + $0x48] sm:$0xff]
    %v116 = vld [vmem:[#allocation7 + $0x50] sm:$0xff]
    %v117 = vld [vmem:[#allocation7 + $0x58] sm:$0xff]
    %v118 = vld [vmem:[#allocation7 + $0x60] sm:$0xff]
    %v119 = vld [vmem:[#allocation7 + $0x68] sm:$0xff]
    %v120 = vld [vmem:[#allocation7 + $0x70] sm:$0xff]
    %v121 = vld [vmem:[#allocation7 + $0x78] sm:$0xff]
    %v122 = vld [vmem:[%s4] sm:$0x1]
    %v124 = vperm.slane %v122, 0
    %126 = vmatpush.msra.mxu0 %v121
    %127 = vmatpush.msra.mxu0 %v120
    %128 = vmatpush.msra.mxu0 %v119
    %129 = vmatpush.msra.mxu0 %v118
    %130 = vmatpush.msra.mxu0 %v117
    %131 = vmatpush.msra.mxu0 %v116
    %132 = vmatpush.msra.mxu0 %v115
    %133 = vmatpush.msra.mxu0 %v114
    %134 = vmatpush.msra.mxu0 %v113
    %135 = vmatpush.msra.mxu0 %v112
    %136 = vmatpush.msra.mxu0 %v111
    %137 = vmatpush.msra.mxu0 %v110
    %138 = vmatpush.msra.mxu0 %v109
    %139 = vmatpush.msra.mxu0 %v108
    %140 = vmatpush.msra.mxu0 %v107
    %141 = vmatpush.msra.mxu0 %v106
    %142 = vmatmul.f32.gmra.mxu0 %v105
    %v143 = vpop.f32.mrf.mxu0
    %v144 = vadd.f32 %v124, %v143
    %145 = vdwg.mxu0
    %v146 = vmax.f32 %v144, 0.0
    %v147 = vld [vmem:[%s5] sm:$0x1]
    %v149 = vperm.slane %v147, 0
    %v151 = vmul.f32 %v146, %v149
    %152 = vadd.xlane.f32.xlu0 %v151
    %v153 = vpop.xlane.xlu0 %152
    %s154 = sld [smem:[#allocation2]]
    %v155 = vstv %s154
    %v156 = vadd.f32 %v153, %v155
    %v157 = vxor.u32 %v156, 2147483648
    %v158 = vmul.f32 %v157, 1.442695
    %v159 = vpow.pop %v158
    %v160 = vadd.f32 %v159, 1.0
    %v161 = vrcp.pop %v160
    %v162 = vmul.f32 %v160, %v161
    %v163 = vsub.f32 1.0, %v162
    %v164 = vmul.f32 %v161, %v163
    %v165 = vadd.f32 %v161, %v164
    %vm166 = vweird.f32 %v160
    %vm167 = vweird.f32 %v161
    %vm168 = vmor %vm166, %vm167
    %v169 = vsel %vm168, %v161, %v165
    %v170 = vand.u32 2147483647, %v160
    %vm171 = vcmp.eq.f32.partialorder %v170, 8.507059e+37
    %v172 = vand.u32 %v160, 2147483648
    %v173 = vor.u32 1.1754944e-38, %v172
    %v174 = vsel %vm171, %v173, %v169
    %v175 = vmul.f32 1.0, %v174
    %vm176 = vcmask 7168
    %177 = vst.msk [vmem:[%s7] sm:$0xff] %vm176, %v175
    // Predicated region
    $region42: #{tpu_custom_call.1} parent=1 // pred_check
      _
    $region43: #{tpu_custom_call.1} parent=1 // pred_check_branch
      %179 = sbr.rel (0) target = $region45
    $region44: #{tpu_custom_call.1} parent=1 // pred_region
      _
    $region45: #{tpu_custom_call.1} parent=1 // pred_fallthru
      _
    // Predicated region
    $region46: #{tpu_custom_call.1} parent=1 // pred_check
      _
    $region47: #{tpu_custom_call.1} parent=1 // pred_check_branch
      %181 = sbr.rel (0) target = $region49
    $region48: #{tpu_custom_call.1} parent=1 // pred_region
      _
    $region49: #{tpu_custom_call.1} parent=1 // pred_fallthru
      _
    %182 = vsyncpa [#allocation4], 1
    %183 = vsyncpa [#allocation6], 1

</llo_original>
